<compile_context>
chip_gen: v5e
topology: v5e:2x2
jax: 0.10.0
libtpu: 0.0.40
codegen_flags: <defaults>
</compile_context>

<pallas_src>
import jax
import jax.numpy as jnp
from jax.experimental import pallas as pl
from jax.experimental.pallas import tpu as pltpu


# ----------------------------------------------------------------------------
# Kernels
# ----------------------------------------------------------------------------
def _sdensity_kernel_scalar(var_ref, out_ref):
    # Fully scalar-path kernel: 1-D SMEM in, 1-D SMEM out.
    out_ref[0] = jnp.exp(10.0 * var_ref[0])


def _sdensity_kernel_vmem(var_ref, out_ref):
    # Fallback kernel: scalar read from SMEM, exp on a tiny (1,1) vector tile
    # (VPU mul + EUP exp), single store to a (1,1) VMEM output tile.
    v = var_ref[0]
    out_ref[...] = jnp.exp(10.0 * jnp.full((1, 1), v, dtype=jnp.float32))


_COST = pl.CostEstimate(flops=1, transcendentals=1, bytes_accessed=8)


def _call_scalar(var_1d: jax.Array) -> jax.Array:
    return pl.pallas_call(
        _sdensity_kernel_scalar,
        out_shape=jax.ShapeDtypeStruct((1,), jnp.float32),
        in_specs=[pl.BlockSpec(memory_space=pltpu.SMEM)],
        out_specs=pl.BlockSpec(memory_space=pltpu.SMEM),
        cost_estimate=_COST,
    )(var_1d)


def _call_vmem(var_1d: jax.Array) -> jax.Array:
    return pl.pallas_call(
        _sdensity_kernel_vmem,
        out_shape=jax.ShapeDtypeStruct((1, 1), jnp.float32),
        in_specs=[pl.BlockSpec(memory_space=pltpu.SMEM)],
        out_specs=pl.BlockSpec(memory_space=pltpu.VMEM),
        cost_estimate=_COST,
    )(var_1d)


# One-time probe: prefer the all-SMEM scalar-path kernel; fall back to the
# VMEM-output variant if Mosaic rejects (or mis-lowers) the scalar exp.
_IMPL = None


def _select_impl():
    global _IMPL
    if _IMPL is None:
        try:
            probe = jax.block_until_ready(
                _call_scalar(jnp.zeros((1,), jnp.float32))
            )
            if abs(float(probe[0]) - 1.0) < 1e-6:  # exp(0) == 1 sanity check
                _IMPL = _call_scalar
            else:
                _IMPL = _call_vmem
        except Exception:
            _IMPL = _call_vmem
    return _IMPL


# ----------------------------------------------------------------------------
# Wrapper / module
# ----------------------------------------------------------------------------
def sdensity_forward(variable: jax.Array) -> jax.Array:
    """Compute inv_s = exp(10 * variable) with a Pallas TPU kernel.

    Args:
        variable: scalar (0-d) float32 learnable parameter.
    Returns:
        inv_s: scalar (0-d) float32.
    """
    var_1d = jnp.reshape(variable.astype(jnp.float32), (1,))
    out = _select_impl()(var_1d)
    # Squeeze (cheap metadata reshape) rather than a scalar-index slice.
    return jnp.squeeze(out)


class SDensity:
    """JAX/Pallas port of the PyTorch SDensity module."""

    def __init__(self, init_val: float):
        # Mirrors nn.Parameter(torch.as_tensor(init_val)).
        self.variable = jnp.asarray(init_val, dtype=jnp.float32)

    def __call__(self) -> jax.Array:
        return sdensity_forward(self.variable)


if __name__ == "__main__":
    # Deterministic "example input": the learnable variable itself.
    key = jax.random.PRNGKey(0)
    init_val = float(jax.random.uniform(key, (), minval=0.0, maxval=0.5))

    model = SDensity(init_val)
    inv_s = jax.block_until_ready(model())

    # Reference check in plain JAX.
    ref = jnp.exp(10.0 * jnp.float32(init_val))
    assert inv_s.shape == (), inv_s.shape
    assert jnp.allclose(inv_s, ref, rtol=1e-5, atol=1e-5), (inv_s, ref)

    print("KERNEL_OK")
</pallas_src>

<mosaic_0001>
module attributes {stable_mosaic.version = 11 : i64} {
  func.func @_sdensity_kernel_scalar(%arg0: memref<1xf32, #tpu.memory_space<smem>>, %arg1: memref<1xf32, #tpu.memory_space<smem>>) attributes {dimension_semantics = [], scalar_prefetch = 0 : i64, scratch_operands = 0 : i64, tpu.core_type = #tpu.core_type<tc>} {
    %c0 = arith.constant 0 : index
    %0 = memref.load %arg0[%c0] : memref<1xf32, #tpu.memory_space<smem>>
    %cst = arith.constant 1.000000e+01 : f32
    %1 = arith.mulf %cst, %0 : f32
    %2 = math.exp %1 : f32
    %c0_0 = arith.constant 0 : index
    %3 = memref.load %arg1[%c0_0] : memref<1xf32, #tpu.memory_space<smem>>
    memref.store %2, %arg1[%c0_0] : memref<1xf32, #tpu.memory_space<smem>>
    return
  }
}

module attributes {stable_mosaic.version = 11 : i64} {
  func.func @_sdensity_kernel_vmem(%arg0: memref<1xf32, #tpu.memory_space<smem>>, %arg1: memref<1x1xf32, #tpu.memory_space<vmem>>) attributes {dimension_semantics = [], scalar_prefetch = 0 : i64, scratch_operands = 0 : i64, tpu.core_type = #tpu.core_type<tc>} {
    %c0 = arith.constant 0 : index
    %0 = memref.load %arg0[%c0] : memref<1xf32, #tpu.memory_space<smem>>
    %1 = vector.broadcast %0 : f32 to vector<1x1xf32>
    %cst = arith.constant 1.000000e+01 : f32
    %2 = vector.broadcast %cst : f32 to vector<1x1xf32>
    %3 = arith.mulf %2, %1 : vector<1x1xf32>
    %4 = math.exp %3 : vector<1x1xf32>
    %c0_0 = arith.constant 0 : index
    %c0_1 = arith.constant 0 : index
    %5 = vector.load %arg1[%c0_0, %c0_1] : memref<1x1xf32, #tpu.memory_space<vmem>>, vector<1x1xf32>
    tpu.vector_store %arg1[%c0_0, %c0_1], %4 {strides = array<i32>} : memref<1x1xf32, #tpu.memory_space<vmem>>, vector<1x1xf32>,
    return
  }
}

</mosaic_0001>

<llo_original>
// kernel: tpu_custom_call.1
$region0: #{tpu_custom_call.1}
  #allocation0 [shape = 'u32[]', space=smem, size = 0x4, offset = 0x4, fixed_abs, tag = 'smem constant byte address 0x4 - core index']
  #allocation1 [shape = 'u32[72,128]{1,0:T(1,128)}', space=vmem, size = 0x9000, scoped, tag = 'internal scratch']
  #allocation2 [shape = 'f32[1]{0:T(128)S(6)}', space=smem, size = 0x200, scoped, tag = 'scoped memory for tpu_custom_call.1']
  %s0 = inlined_call_operand.<no memory space> [shape: f32[1], index: 0, kind: input, shape index: {}]
  %s1 = inlined_call_operand.hbm [shape: f32[1], index: 1, kind: output, shape index: {}]
  %s2 = sld [smem:[#allocation0]]
  $region14: #{tpu_custom_call.1} parent=0
    _
  %s4 = ssub.s32 1, %s2
  %s5 = scalar_select 0, %s4, %s2
  %6 = sst [smem:[#allocation2]] %s0
  $region1: #{tpu_custom_call.1} parent=0
    #allocation3 [shape = 'u8[512]{0}', space=smem, size = 0x200, scoped, tag = 'output window, operand 0, single buffered']
    #allocation4 [shape = 's32[1]{0}', space=sflag, size = 0x4, scoped, tag = 'scoped memory for tpu_custom_call.1']
    %7 = vsyncpa [#allocation4], 0
    // Predicated region
    $region2: #{tpu_custom_call.1} parent=1 // pred_check
      _
    $region3: #{tpu_custom_call.1} parent=1 // pred_check_branch
      %9 = sbr.rel (0) target = $region5
    $region4: #{tpu_custom_call.1} parent=1 // pred_region
      _
    $region5: #{tpu_custom_call.1} parent=1 // pred_fallthru
      _
    %s10 = sld [smem:[#allocation2]]
    %s11 = smul.f32 %s10, 10.0
    %v12 = vstv %s11
    %v13 = vmul.f32 %v12, 1.442695
    %v14 = vpow.pop %v13
    %s15 = vtos %v14
    %s16 = scalar_lea.smem [#allocation3], 0
    %17 = sst [smem:[%s16]] %s15
    // Predicated region
    $region6: #{tpu_custom_call.1} parent=1 // pred_check
      _
    $region7: #{tpu_custom_call.1} parent=1 // pred_check_branch
      %19 = sbr.rel (0) target = $region9
    $region8: #{tpu_custom_call.1} parent=1 // pred_region
      %21 = vsyncadd [#allocation4], 0
      %s23 = sshll.u32 %s1, 4
      %s24 = int_to_ptr.hbm [resolvable:$true] %s23
      %26 = dma.smem_to_hbm [#allocation3], 16, %s24, [#allocation4]
    $region9: #{tpu_custom_call.1} parent=1 // pred_fallthru
      _
    // Predicated region
    $region10: #{tpu_custom_call.1} parent=1 // pred_check
      _
    $region11: #{tpu_custom_call.1} parent=1 // pred_check_branch
      %28 = sbr.rel (0) target = $region13
    $region12: #{tpu_custom_call.1} parent=1 // pred_region
      %30 = dma.done [#allocation4], 16
    $region13: #{tpu_custom_call.1} parent=1 // pred_fallthru
      _
    %31 = sfence
    %32 = vsyncpa [#allocation4], 1

// kernel: tpu_custom_call.1
$region0: #{tpu_custom_call.1}
  #allocation0 [shape = 'u32[]', space=smem, size = 0x4, offset = 0x4, fixed_abs, tag = 'smem constant byte address 0x4 - core index']
  #allocation1 [shape = 'u32[72,128]{1,0:T(1,128)}', space=vmem, size = 0x9000, scoped, tag = 'internal scratch']
  #allocation2 [shape = 'f32[1]{0:T(128)S(6)}', space=smem, size = 0x200, scoped, tag = 'scoped memory for tpu_custom_call.1']
  %s0 = inlined_call_operand.<no memory space> [shape: f32[1], index: 0, kind: input, shape index: {}]
  %s1 = inlined_call_operand.hbm [shape: f32[1,1], index: 1, kind: output, shape index: {}]
  %s2 = sld [smem:[#allocation0]]
  $region14: #{tpu_custom_call.1} parent=0
    _
  %s4 = ssub.s32 1, %s2
  %s5 = scalar_select 0, %s4, %s2
  %6 = sst [smem:[#allocation2]] %s0
  $region1: #{tpu_custom_call.1} parent=0
    #allocation3 [shape = 'u8[512]{0}', space=vmem, size = 0x400, scoped, tag = 'output window, operand 0, single buffered']
    #allocation4 [shape = 's32[1]{0}', space=sflag, size = 0x4, scoped, tag = 'scoped memory for tpu_custom_call.1']
    %7 = vsyncpa [#allocation4], 0
    // Predicated region
    $region2: #{tpu_custom_call.1} parent=1 // pred_check
      _
    $region3: #{tpu_custom_call.1} parent=1 // pred_check_branch
      %9 = sbr.rel (0) target = $region5
    $region4: #{tpu_custom_call.1} parent=1 // pred_region
      _
    $region5: #{tpu_custom_call.1} parent=1 // pred_fallthru
      _
    %s10 = sld [smem:[#allocation2]]
    %v11 = vstv %s10
    %v12 = vmul.f32 %v11, 10.0
    %v13 = vmul.f32 %v12, 1.442695
    %v14 = vpow.pop %v13
    %vm15 = vcmask 0
    %16 = vst.msk [vmem:[#allocation3] sm:$0x1] %vm15, %v14
    // Predicated region
    $region6: #{tpu_custom_call.1} parent=1 // pred_check
      _
    $region7: #{tpu_custom_call.1} parent=1 // pred_check_branch
      %18 = sbr.rel (0) target = $region9
    $region8: #{tpu_custom_call.1} parent=1 // pred_region
      %20 = vsyncadd [#allocation4], 0
      %s22 = sshll.u32 [#allocation3], 4
      %s23 = int_to_ptr.vmem [resolvable:$true] %s22
      %s24 = sshll.u32 %s1, 4
      %s25 = int_to_ptr.hbm [resolvable:$true] %s24
      %27 = dma.vmem_to_hbm [thread:$0]  %s23, 16, %s25, [#allocation4]
    $region9: #{tpu_custom_call.1} parent=1 // pred_fallthru
      _
    // Predicated region
    $region10: #{tpu_custom_call.1} parent=1 // pred_check
      _
    $region11: #{tpu_custom_call.1} parent=1 // pred_check_branch
      %29 = sbr.rel (0) target = $region13
    $region12: #{tpu_custom_call.1} parent=1 // pred_region
      %31 = dma.done [#allocation4], 16
    $region13: #{tpu_custom_call.1} parent=1 // pred_fallthru
      _
    %32 = vsyncpa [#allocation4], 1

</llo_original>
